<compile_context>
chip_gen: v7x
topology: tpu7x:2x2x1
jax: 0.10.0
libtpu: 0.0.40
codegen_flags: <defaults>
</compile_context>

<pallas_src>
import functools

import jax
import jax.numpy as jnp
from jax.experimental import pallas as pl
from jax.experimental.pallas import tpu as pltpu

MASKED_WITH = -1.0   # module default masked_with=-1
LANES = 128
TM_MAX = 4096        # sublane rows per grid step (sweepable 2048-8192; 4096 -> 2 MiB f32 block)


def _round_up(x, m):
    return (x + m - 1) // m * m


def _num_tensorcores():
    """2 TensorCores per chip on v7x, 1 on v5e/v6e. Falls back to 1 if unknown."""
    try:
        kind = jax.devices()[0].device_kind.lower()
    except Exception:
        return 1
    return 2 if "v7" in kind else 1


def _masked_bce_kernel(x_ref, t_ref, out_ref, *, masked_with, total_rows,
                       num_tiles, tm, has_overflow, has_tail):
    c = pl.program_id(0)
    i = pl.program_id(1)

    # Init this core's lane-dense vector accumulator (its own output block) once.
    @pl.when(i == 0)
    def _():
        out_ref[...] = jnp.zeros_like(out_ref)

    tile_idx = c * pl.num_programs(1) + i
    row0 = tile_idx * tm

    def compute():
        x = x_ref[...].astype(jnp.float32)
        t = t_ref[...].astype(jnp.float32)

        # torch.binary_cross_entropy clamps each log term at -100.
        log_x = jnp.maximum(jnp.log(x), -100.0)
        log_1mx = jnp.maximum(jnp.log(1.0 - x), -100.0)
        loss = -(t * log_x + (1.0 - t) * log_1mx)
        keep = t != masked_with

        def accumulate(masked_loss):
            # (tm,128) -> (8,128): pure elementwise (VPU) adds into the resident
            # accumulator; the lone cross-lane reduce happens once, outside, in JAX.
            out_ref[...] += masked_loss.reshape(tm // 8, 8, LANES).sum(axis=0)

        if has_tail:
            # Fast path: fully in-bounds tile -> only the masked_with select.
            @pl.when(row0 + tm <= total_rows)
            def _():
                accumulate(jnp.where(keep, loss, 0.0))

            # Tail path: last (partial) tile -> also mask rows past the logical end.
            # Keep the select form: out-of-bounds rows may hold garbage, so `loss`
            # there can be NaN; jnp.where does not propagate it (keep*loss would).
            @pl.when(row0 + tm > total_rows)
            def _():
                row_ids = row0 + jax.lax.broadcasted_iota(jnp.int32, (tm, LANES), 0)
                keep_tail = jnp.logical_and(keep, row_ids < total_rows)
                accumulate(jnp.where(keep_tail, loss, 0.0))
        else:
            accumulate(jnp.where(keep, loss, 0.0))

    if has_overflow:
        # Clamped megacore-padding steps do nothing (their DMA index is clamped too).
        pl.when(tile_idx < num_tiles)(compute)
    else:
        compute()


def masked_bce_loss(inp, target, masked_with=MASKED_WITH):
    """Pallas implementation of MaskedBCELoss.forward(input, target)."""
    # target.view(input.shape) — glue in plain JAX (validates sizes, zero-copy).
    target = target.reshape(inp.shape)

    x = inp.reshape(-1)
    t = target.reshape(-1)
    n = x.shape[0]
    if n == 0:
        return jnp.float32(0.0)

    masked_with_f = float(masked_with)
    rows = n // LANES
    rem = n - rows * LANES

    # <=127-element remainder: tiny plain-JAX epilogue instead of a full-array pad copy.
    rem_sum = jnp.float32(0.0)
    if rem:
        x_t = x[rows * LANES:].astype(jnp.float32)
        t_t = t[rows * LANES:].astype(jnp.float32)
        lx = jnp.maximum(jnp.log(x_t), -100.0)
        l1mx = jnp.maximum(jnp.log(1.0 - x_t), -100.0)
        lt = -(t_t * lx + (1.0 - t_t) * l1mx)
        rem_sum = jnp.where(t_t == masked_with_f, 0.0, lt).sum()

    if rows == 0:
        return rem_sum

    # Lane-dense 2-D view of the aligned prefix; dtype passed through unchanged
    # (bf16 inputs halve HBM traffic; upcast to f32 happens in VMEM).
    x2 = x[: rows * LANES].reshape(rows, LANES)
    t2 = t[: rows * LANES].reshape(rows, LANES)

    tm = min(TM_MAX, _round_up(rows, 8))
    num_tiles = -(-rows // tm)

    num_cores = _num_tensorcores()
    if num_tiles < num_cores:
        num_cores = 1                       # no point splitting a single tile
    tiles_per_core = -(-num_tiles // num_cores)

    has_overflow = num_cores * tiles_per_core > num_tiles
    has_tail = (rows % tm) != 0

    def in_index_map(c, i):
        idx = c * tiles_per_core + i
        if has_overflow:
            # Clamp so padded (core, step) pairs never DMA out of bounds; the kernel
            # skips their compute entirely.
            idx = jnp.minimum(idx, num_tiles - 1)
        return (idx, 0)

    kernel = functools.partial(
        _masked_bce_kernel,
        masked_with=masked_with_f,
        total_rows=rows,
        num_tiles=num_tiles,
        tm=tm,
        has_overflow=has_overflow,
        has_tail=has_tail,
    )

    partials = pl.pallas_call(
        kernel,
        out_shape=jax.ShapeDtypeStruct((num_cores * 8, LANES), jnp.float32),
        grid_spec=pltpu.PrefetchScalarGridSpec(
            num_scalar_prefetch=0,
            grid=(num_cores, tiles_per_core),
            in_specs=[
                pl.BlockSpec((tm, LANES), in_index_map),
                pl.BlockSpec((tm, LANES), in_index_map),
            ],
            out_specs=pl.BlockSpec((8, LANES), lambda c, i: (c, 0)),
        ),
        compiler_params=pltpu.CompilerParams(
            dimension_semantics=("parallel", "arbitrary"),
        ),
    )(x2, t2)

    # Single tiny cross-lane/cross-core reduction in plain JAX.
    return jnp.sum(partials) + rem_sum


def _ref_loss(inp, tgt, masked_with=MASKED_WITH):
    log_x = jnp.maximum(jnp.log(inp), -100.0)
    log_1mx = jnp.maximum(jnp.log(1.0 - inp), -100.0)
    loss = -(tgt * log_x + (1.0 - tgt) * log_1mx)
    return jnp.where(tgt == masked_with, 0.0, loss).sum()


if __name__ == "__main__":
    key = jax.random.PRNGKey(0)
    k1, k2, k3 = jax.random.split(key, 3)

    # Shapes consistent with the module: input in (0,1), target in {0,1}
    # with some positions masked with -1; target passed flat to exercise .view().
    B, C, H, W = 2, 4, 16, 16
    inp = jax.nn.sigmoid(jax.random.normal(k1, (B, C, H, W), dtype=jnp.float32))
    tgt = jax.random.bernoulli(k2, p=0.5, shape=(B, C, H, W)).astype(jnp.float32)
    mask = jax.random.bernoulli(k3, p=0.3, shape=(B, C, H, W))
    tgt = jnp.where(mask, MASKED_WITH, tgt)

    out = jax.block_until_ready(masked_bce_loss(inp, tgt.reshape(-1)))
    ref = _ref_loss(inp, tgt)
    assert jnp.allclose(out, ref, rtol=1e-5, atol=1e-3), (out, ref)

    # Unaligned-length case: exercises the in-kernel tail mask and the plain-JAX
    # remainder epilogue (n = 500 -> 3 full lane rows + 116-element remainder).
    k4, k5, k6 = jax.random.split(k3, 3)
    inp2 = jax.nn.sigmoid(jax.random.normal(k4, (5, 100), dtype=jnp.float32))
    tgt2 = jax.random.bernoulli(k5, p=0.5, shape=(5, 100)).astype(jnp.float32)
    mask2 = jax.random.bernoulli(k6, p=0.3, shape=(5, 100))
    tgt2 = jnp.where(mask2, MASKED_WITH, tgt2)

    out2 = jax.block_until_ready(masked_bce_loss(inp2, tgt2.reshape(-1)))
    ref2 = _ref_loss(inp2, tgt2)
    assert jnp.allclose(out2, ref2, rtol=1e-5, atol=1e-3), (out2, ref2)

    print("KERNEL_OK")
</pallas_src>

<mosaic_0001>
module attributes {stable_mosaic.version = 11 : i64} {
  func.func @_masked_bce_kernel(%arg0: i32, %arg1: i32, %arg2: memref<16x128xf32, #tpu.memory_space<vmem>>, %arg3: memref<16x128xf32, #tpu.memory_space<vmem>>, %arg4: memref<8x128xf32, #tpu.memory_space<vmem>>) attributes {dimension_semantics = [#tpu.dimension_semantics<parallel>, #tpu.dimension_semantics<arbitrary>], iteration_bounds = array<i64: 1, 1>, scalar_prefetch = 0 : i64, scratch_operands = 0 : i64, tpu.core_type = #tpu.core_type<tc>, window_params = [{transform_indices = @transform_0, window_bounds = array<i64: 16, 128>}, {transform_indices = @transform_1, window_bounds = array<i64: 16, 128>}, {transform_indices = @transform_2, window_bounds = array<i64: 8, 128>}]} {
    %c0_i32 = arith.constant 0 : i32
    %0 = arith.cmpi eq, %arg1, %c0_i32 : i32
    %1 = arith.extui %0 : i1 to i32
    %c0_i32_0 = arith.constant 0 : i32
    %2 = arith.cmpi ne, %1, %c0_i32_0 : i32
    scf.if %2 {
      %cst_15 = arith.constant 0.000000e+00 : f32
      %29 = vector.broadcast %cst_15 : f32 to vector<8x128xf32>
      %c0_16 = arith.constant 0 : index
      %c0_17 = arith.constant 0 : index
      %30 = vector.load %arg4[%c0_16, %c0_17] : memref<8x128xf32, #tpu.memory_space<vmem>>, vector<8x128xf32>
      tpu.vector_store %arg4[%c0_16, %c0_17], %29 {strides = array<i32>} : memref<8x128xf32, #tpu.memory_space<vmem>>, vector<8x128xf32>,
    } else {
    }
    %c0 = arith.constant 0 : index
    %c0_1 = arith.constant 0 : index
    %3 = vector.load %arg2[%c0, %c0_1] : memref<16x128xf32, #tpu.memory_space<vmem>>, vector<16x128xf32>
    %c0_2 = arith.constant 0 : index
    %c0_3 = arith.constant 0 : index
    %4 = vector.load %arg3[%c0_2, %c0_3] : memref<16x128xf32, #tpu.memory_space<vmem>>, vector<16x128xf32>
    %5 = math.log %3 : vector<16x128xf32>
    %cst = arith.constant -1.000000e+02 : f32
    %6 = vector.broadcast %cst : f32 to vector<16x128xf32>
    %7 = arith.maximumf %5, %6 : vector<16x128xf32>
    %cst_4 = arith.constant 1.000000e+00 : f32
    %8 = vector.broadcast %cst_4 : f32 to vector<16x128xf32>
    %9 = arith.subf %8, %3 : vector<16x128xf32>
    %10 = math.log %9 : vector<16x128xf32>
    %cst_5 = arith.constant -1.000000e+02 : f32
    %11 = vector.broadcast %cst_5 : f32 to vector<16x128xf32>
    %12 = arith.maximumf %10, %11 : vector<16x128xf32>
    %13 = arith.mulf %4, %7 : vector<16x128xf32>
    %cst_6 = arith.constant 1.000000e+00 : f32
    %14 = vector.broadcast %cst_6 : f32 to vector<16x128xf32>
    %15 = arith.subf %14, %4 : vector<16x128xf32>
    %16 = arith.mulf %15, %12 : vector<16x128xf32>
    %17 = arith.addf %13, %16 : vector<16x128xf32>
    %cst_7 = arith.constant 0.000000e+00 : f32
    %18 = vector.broadcast %cst_7 : f32 to vector<16x128xf32>
    %19 = arith.subf %18, %17 : vector<16x128xf32>
    %cst_8 = arith.constant -1.000000e+00 : f32
    %20 = vector.broadcast %cst_8 : f32 to vector<16x128xf32>
    %21 = arith.cmpf one, %4, %20 : vector<16x128xf32>
    %cst_9 = arith.constant 0.000000e+00 : f32
    %22 = vector.broadcast %cst_9 : f32 to vector<16x128xf32>
    %23 = arith.select %21, %19, %22 : vector<16x128xi1>, vector<16x128xf32>
    %c0_10 = arith.constant 0 : index
    %c0_11 = arith.constant 0 : index
    %24 = vector.load %arg4[%c0_10, %c0_11] : memref<8x128xf32, #tpu.memory_space<vmem>>, vector<8x128xf32>
    %25 = vector.shape_cast %23 : vector<16x128xf32> to vector<2x8x128xf32>
    %cst_12 = arith.constant dense<0.000000e+00> : vector<8x128xf32>
    %26 = vector.multi_reduction <add>, %25, %cst_12 [0] : vector<2x8x128xf32> to vector<8x128xf32>
    %27 = arith.addf %24, %26 : vector<8x128xf32>
    %c0_13 = arith.constant 0 : index
    %c0_14 = arith.constant 0 : index
    %28 = vector.load %arg4[%c0_13, %c0_14] : memref<8x128xf32, #tpu.memory_space<vmem>>, vector<8x128xf32>
    tpu.vector_store %arg4[%c0_13, %c0_14], %27 {strides = array<i32>} : memref<8x128xf32, #tpu.memory_space<vmem>>, vector<8x128xf32>,
    return
  }
  func.func @transform_0(%arg0: i32, %arg1: i32) -> (i32, i32) {
    %c1_i32 = arith.constant 1 : i32
    %0 = arith.muli %arg0, %c1_i32 : i32
    %1 = arith.addi %0, %arg1 : i32
    %c0_i32 = arith.constant 0 : i32
    %c0_i32_0 = arith.constant 0 : i32
    return %1, %c0_i32 : i32, i32
  }
  func.func @transform_1(%arg0: i32, %arg1: i32) -> (i32, i32) {
    %c1_i32 = arith.constant 1 : i32
    %0 = arith.muli %arg0, %c1_i32 : i32
    %1 = arith.addi %0, %arg1 : i32
    %c0_i32 = arith.constant 0 : i32
    %c0_i32_0 = arith.constant 0 : i32
    return %1, %c0_i32 : i32, i32
  }
  func.func @transform_2(%arg0: i32, %arg1: i32) -> (i32, i32) {
    %c0_i32 = arith.constant 0 : i32
    %c0_i32_0 = arith.constant 0 : i32
    return %arg0, %c0_i32 : i32, i32
  }
}

</mosaic_0001>

<llo_original>
// kernel: tpu_custom_call.1
$region0: #{tpu_custom_call.1}
  #allocation0 [shape = 'u32[]', space=smem, size = 0x4, offset = 0x4, fixed_abs, tag = 'smem constant byte address 0x4 - core index']
  #allocation1 [shape = 'u32[144,128]{1,0:T(1,128)}', space=vmem, size = 0x12000, scoped, tag = 'internal scratch']
  %s0 = inlined_call_operand.hbm [shape: f32[16,128], index: 0, kind: input, shape index: {}]
  %s1 = inlined_call_operand.hbm [shape: f32[16,128], index: 1, kind: input, shape index: {}]
  %s2 = inlined_call_operand.hbm [shape: f32[8,128], index: 2, kind: output, shape index: {}]
  %s3 = sld [smem:[#allocation0]]
  $region30: #{tpu_custom_call.1} parent=0
    _
  %s5 = ssub.s32 1, %s3
  %s6 = scalar_select 0, %s5, %s3
  $region1: #{tpu_custom_call.1} parent=0
    #allocation2 [shape = 'u8[8192]{0}', space=vmem, size = 0x2000, scoped, tag = 'input window, operand 0, single buffered']
    #allocation3 [shape = 's32[1]{0}', space=sflag, size = 0x4, scoped, tag = 'scoped memory for tpu_custom_call.1']
    #allocation4 [shape = 's32[1]{0}', space=sflag, size = 0x4, scoped, tag = 'scoped memory for tpu_custom_call.1']
    #allocation5 [shape = 'u8[8192]{0}', space=vmem, size = 0x2000, scoped, tag = 'input window, operand 1, single buffered']
    #allocation6 [shape = 's32[1]{0}', space=sflag, size = 0x4, scoped, tag = 'scoped memory for tpu_custom_call.1']
    #allocation7 [shape = 'u8[4096]{0}', space=vmem, size = 0x1000, scoped, tag = 'output window, operand 0, single buffered']
    %7 = vsyncpa [#allocation3], 0
    %8 = vsyncpa [#allocation6], 0
    %9 = vsyncpa [#allocation4], 0
    // Predicated region
    $region2: #{tpu_custom_call.1} parent=1 // pred_check
      _
    $region3: #{tpu_custom_call.1} parent=1 // pred_check_branch
      %11 = sbr.rel (0) target = $region5
    $region4: #{tpu_custom_call.1} parent=1 // pred_region
      %s12 = sadd.s32 0, 0
      %s13 = smul.u32 2, %s12
      %s15 = ssub.s32 256, 256
      %16 = vsyncadd [#allocation3], %s15
      %s17 = smul.addr %s13, 128
      %s18 = scalar_lea.hbm %s0, %s17
      %s19 = sshll.u32 [#allocation2], 4
      %s20 = int_to_ptr.vmem [resolvable:$true] %s19
      %25 = dma.hbm_to_vmem [thread:$0]  %s18, 256, %s20, [#allocation3], 128, 128, 8
    $region5: #{tpu_custom_call.1} parent=1 // pred_fallthru
      _
    // Predicated region
    $region6: #{tpu_custom_call.1} parent=1 // pred_check
      _
    $region7: #{tpu_custom_call.1} parent=1 // pred_check_branch
      %27 = sbr.rel (0) target = $region9
    $region8: #{tpu_custom_call.1} parent=1 // pred_region
      %s28 = sadd.s32 0, 0
      %s29 = smul.u32 2, %s28
      %s31 = ssub.s32 256, 256
      %32 = vsyncadd [#allocation6], %s31
      %s33 = smul.addr %s29, 128
      %s34 = scalar_lea.hbm %s1, %s33
      %s35 = sshll.u32 [#allocation5], 4
      %s36 = int_to_ptr.vmem [resolvable:$true] %s35
      %41 = dma.hbm_to_vmem [thread:$0]  %s34, 256, %s36, [#allocation6], 128, 128, 8
    $region9: #{tpu_custom_call.1} parent=1 // pred_fallthru
      _
    // Predicated region
    $region10: #{tpu_custom_call.1} parent=1 // pred_check
      _
    $region11: #{tpu_custom_call.1} parent=1 // pred_check_branch
      %43 = sbr.rel (0) target = $region13
    $region12: #{tpu_custom_call.1} parent=1 // pred_region
      %44 = dma.done [#allocation3], 256
    $region13: #{tpu_custom_call.1} parent=1 // pred_fallthru
      _
    // Predicated region
    $region14: #{tpu_custom_call.1} parent=1 // pred_check
      _
    $region15: #{tpu_custom_call.1} parent=1 // pred_check_branch
      %46 = sbr.rel (0) target = $region17
    $region16: #{tpu_custom_call.1} parent=1 // pred_region
      %47 = dma.done [#allocation6], 256
    $region17: #{tpu_custom_call.1} parent=1 // pred_fallthru
      _
    %s48 = sadd.s32 0, 0
    %s49 = smul.u32 2, %s48
    %s50 = sadd.s32 0, 0
    %s51 = smul.u32 2, %s50
    %p52 = scmp.eq.s32.totalorder 0, 0
    // Predicated region
    $region18: #{tpu_custom_call.1} parent=1 // pred_check
      %p53 = pneg %p52
    $region19: #{tpu_custom_call.1} parent=1 // pred_check_branch
      %55 = sbr.rel (%p53) target = $region21
    $region20: #{tpu_custom_call.1} parent=1 // pred_region
      %56 = vst [vmem:[#allocation7] sm:$0xff] 0.0
    $region21: #{tpu_custom_call.1} parent=1 // pred_fallthru
      _
    %v57 = vld [vmem:[#allocation2] sm:$0xff]
    %v58 = vld [vmem:[#allocation2 + $0x8] sm:$0xff]
    %v59 = vld [vmem:[#allocation5] sm:$0xff]
    %v60 = vld [vmem:[#allocation5 + $0x8] sm:$0xff]
    %v61 = vlog2.pop %v57
    %v62 = vmul.f32 %v61, 0.6931472
    %v63 = vlog2.pop %v58
    %v64 = vmul.f32 %v63, 0.6931472
    %v65 = vmax.f32 %v62, -100.0
    %v66 = vmax.f32 %v64, -100.0
    %v67 = vsub.f32 1.0, %v57
    %v68 = vsub.f32 1.0, %v58
    %v69 = vlog2.pop %v67
    %v70 = vmul.f32 %v69, 0.6931472
    %v71 = vlog2.pop %v68
    %v72 = vmul.f32 %v71, 0.6931472
    %v73 = vmax.f32 %v70, -100.0
    %v74 = vmax.f32 %v72, -100.0
    %v75 = vmul.f32 %v59, %v65
    %v76 = vmul.f32 %v60, %v66
    %v77 = vsub.f32 1.0, %v59
    %v78 = vsub.f32 1.0, %v60
    %v79 = vmul.f32 %v77, %v73
    %v80 = vmul.f32 %v78, %v74
    %v81 = vadd.f32 %v75, %v79
    %v82 = vadd.f32 %v76, %v80
    %v83 = vsub.f32 0.0, %v81
    %v84 = vsub.f32 0.0, %v82
    %vm85 = vcmp.ne.f32.partialorder %v59, -1.0
    %vm86 = vcmp.ne.f32.partialorder %v60, -1.0
    %v87 = vsel %vm85, %v83, 0.0
    %v88 = vsel %vm86, %v84, 0.0
    %v89 = vld [vmem:[#allocation7] sm:$0xff]
    %v90 = vadd.f32 %v87, %v88
    %v91 = vadd.f32 %v89, %v90
    %92 = vst [vmem:[#allocation7] sm:$0xff] %v91
    // Predicated region
    $region22: #{tpu_custom_call.1} parent=1 // pred_check
      _
    $region23: #{tpu_custom_call.1} parent=1 // pred_check_branch
      %94 = sbr.rel (0) target = $region25
    $region24: #{tpu_custom_call.1} parent=1 // pred_region
      %s96 = ssub.s32 128, 128
      %97 = vsyncadd [#allocation4], %s96
      %s99 = sshll.u32 [#allocation7], 4
      %s100 = int_to_ptr.vmem [resolvable:$true] %s99
      %102 = dma.vmem_to_hbm [thread:$0]  %s100, 128, %s2, [#allocation4]
    $region25: #{tpu_custom_call.1} parent=1 // pred_fallthru
      _
    // Predicated region
    $region26: #{tpu_custom_call.1} parent=1 // pred_check
      _
    $region27: #{tpu_custom_call.1} parent=1 // pred_check_branch
      %104 = sbr.rel (0) target = $region29
    $region28: #{tpu_custom_call.1} parent=1 // pred_region
      %105 = dma.done [#allocation4], 128
    $region29: #{tpu_custom_call.1} parent=1 // pred_fallthru
      _
    %106 = vsyncpa [#allocation3], 1
    %107 = vsyncpa [#allocation6], 1
    %108 = vsyncpa [#allocation4], 1

</llo_original>
